<compile_context>
chip_gen: v5e
topology: v5e:2x2
jax: 0.10.0
libtpu: 0.0.40
codegen_flags: <defaults>
</compile_context>

<pallas_src>
import functools
import math

import jax
import jax.numpy as jnp
from jax import lax
from jax.experimental import pallas as pl
from jax.experimental.pallas import tpu as pltpu


def _rmsnorm_kernel(x_ref, s_ref, o_ref, *, eps: float, inv_dim: float):
    # x_ref: (TR, DIM) row tile; s_ref: (1, DIM) precomputed f32 scale.
    x = x_ref[...].astype(jnp.float32)
    ms = jnp.sum(x * x, axis=-1, keepdims=True) * inv_dim
    inv = lax.rsqrt(ms + eps)
    o_ref[...] = (x * inv * s_ref[...]).astype(o_ref.dtype)


def _vmem_capacity_bytes() -> int:
    """Trace-time VMEM capacity query with a conservative (v7x) fallback."""
    try:
        info = pltpu.get_tpu_info()
        cap = getattr(info, "vmem_capacity_bytes", None)
        if cap:
            return int(cap)
    except Exception:
        pass
    return 64 << 20  # v7x per-TC VMEM; safe lower bound for all generations.


def rmsnorm(x: jax.Array,
            weight: jax.Array,
            *,
            eps: float = 1e-6,
            add_unit_offset: bool = True) -> jax.Array:
    """RMSNorm over the last axis of x; returns array with x.dtype."""
    orig_shape = x.shape
    dim = orig_shape[-1]
    assert weight.shape == (dim,)

    rows = math.prod(orig_shape[:-1]) if len(orig_shape) > 1 else 1
    x2d = x.reshape(rows, dim)

    # Hoisted weight prep: tiny (dim,) vector op in the wrapper, resident in
    # VMEM as a single (1, dim) f32 block for the whole grid.
    wf = weight.astype(jnp.float32)
    scale2d = ((1.0 + wf) if add_unit_offset else wf).reshape(1, dim)

    # --- VMEM budget / limit derived from hardware. -------------------------
    vmem_cap = _vmem_capacity_bytes()
    vmem_limit = min(int(vmem_cap * 0.75), 112 << 20)   # 96 MiB v5e/v6e, 48 MiB v7x
    budget = int(vmem_limit * 0.75)                     # headroom for temps/scale

    # --- Row tile: biggest tile that fits the budget, sublane-aligned. ------
    itemsize = jnp.dtype(x.dtype).itemsize
    pack = {4: 8, 2: 16, 1: 32}.get(itemsize, 8)  # rows per sublane group
    # Double-buffered input + output tiles, plus ~3 live f32 intermediates.
    per_row = 2 * 2 * dim * itemsize + 3 * dim * 4
    tr = (budget // per_row) // pack * pack
    tr = max(pack, min(tr, 1024))

    # Keep the grid >= MIN_STEPS when rows permit: feeds both v7x TCs and
    # keeps the double-buffer pipeline active for small/medium inputs.
    MIN_STEPS = 8
    tr_cap_for_steps = max(pack, (rows // MIN_STEPS) // pack * pack)
    tr = min(tr, tr_cap_for_steps)

    rows_rounded = ((rows + pack - 1) // pack) * pack
    tr = min(tr, rows_rounded)
    tr = max(tr, pack)

    grid = (pl.cdiv(rows, tr),)

    kernel = functools.partial(_rmsnorm_kernel, eps=eps, inv_dim=1.0 / float(dim))

    out2d = pl.pallas_call(
        kernel,
        out_shape=jax.ShapeDtypeStruct((rows, dim), x.dtype),
        grid_spec=pltpu.PrefetchScalarGridSpec(
            num_scalar_prefetch=0,
            grid=grid,
            in_specs=[
                pl.BlockSpec((tr, dim), lambda i: (i, 0)),   # x row tile
                pl.BlockSpec((1, dim), lambda i: (0, 0)),    # scale (resident)
            ],
            out_specs=pl.BlockSpec((tr, dim), lambda i: (i, 0)),
        ),
        compiler_params=pltpu.CompilerParams(
            dimension_semantics=("parallel",),
            vmem_limit_bytes=vmem_limit,
        ),
    )(x2d, scale2d)

    return out2d.reshape(orig_shape)


def _rmsnorm_ref(x, weight, eps=1e-6, add_unit_offset=True):
    xf = x.astype(jnp.float32)
    normed = xf * lax.rsqrt(jnp.mean(xf * xf, axis=-1, keepdims=True) + eps)
    w = weight.astype(jnp.float32)
    out = normed * ((1.0 + w) if add_unit_offset else w)
    return out.astype(x.dtype)


def _check(x, weight, tol):
    out = jax.block_until_ready(rmsnorm(x, weight))
    ref = _rmsnorm_ref(x, weight)
    assert out.dtype == x.dtype
    assert out.shape == x.shape
    err = jnp.max(jnp.abs(out.astype(jnp.float32) - ref.astype(jnp.float32)))
    assert float(err) < tol, f"max abs err {float(err)}"


if __name__ == "__main__":
    key = jax.random.PRNGKey(0)
    kx, kw, kx2, kw2 = jax.random.split(key, 4)

    # Small shape matching the module's usage: (batch, seq, dim).
    # dim=32 is not a multiple of 128, exercising the full-dim (masked-lane)
    # block path with no wrapper pad/slice.
    batch, seq, dim = 2, 8, 32
    x = jax.random.normal(kx, (batch, seq, dim), dtype=jnp.float32).astype(
        jnp.bfloat16)
    # nn.Parameter(torch.zeros(dim)) -> (dim,); use small nonzero values so the
    # (1 + weight) scale path is exercised.
    weight = 0.1 * jax.random.normal(kw, (dim,), dtype=jnp.float32)
    _check(x, weight, tol=1e-2)

    # Second check: rows not a multiple of the tile (exercises the cdiv /
    # partial-last-block path) with a lane-aligned hidden dim, in f32.
    x2 = jax.random.normal(kx2, (3, 11, 256), dtype=jnp.float32)
    weight2 = 0.1 * jax.random.normal(kw2, (256,), dtype=jnp.float32)
    _check(x2, weight2, tol=1e-5)

    print("KERNEL_OK")
</pallas_src>

<mosaic_0001>
module attributes {stable_mosaic.version = 11 : i64} {
  func.func @_rmsnorm_kernel(%arg0: i32, %arg1: memref<16x32xbf16, #tpu.memory_space<vmem>>, %arg2: memref<1x32xf32, #tpu.memory_space<vmem>>, %arg3: memref<16x32xbf16, #tpu.memory_space<vmem>>) attributes {dimension_semantics = [#tpu.dimension_semantics<parallel>], iteration_bounds = array<i64: 1>, scalar_prefetch = 0 : i64, scratch_operands = 0 : i64, tpu.core_type = #tpu.core_type<tc>, window_params = [{transform_indices = @transform_0, window_bounds = array<i64: 16, 32>}, {pipeline_mode = #tpu.pipeline_mode<synchronous>, transform_indices = @transform_1, window_bounds = array<i64: 1, 32>}, {transform_indices = @transform_2, window_bounds = array<i64: 16, 32>}]} {
    %c0 = arith.constant 0 : index
    %c0_0 = arith.constant 0 : index
    %0 = vector.load %arg1[%c0, %c0_0] : memref<16x32xbf16, #tpu.memory_space<vmem>>, vector<16x32xbf16>
    %1 = arith.extf %0 : vector<16x32xbf16> to vector<16x32xf32>
    %2 = arith.mulf %1, %1 : vector<16x32xf32>
    %cst = arith.constant dense<0.000000e+00> : vector<16xf32>
    %3 = vector.multi_reduction <add>, %2, %cst [1] : vector<16x32xf32> to vector<16xf32>
    %4 = vector.shape_cast %3 : vector<16xf32> to vector<16x1xf32>
    %cst_1 = arith.constant 3.125000e-02 : f32
    %5 = vector.broadcast %cst_1 : f32 to vector<16x1xf32>
    %6 = arith.mulf %4, %5 : vector<16x1xf32>
    %cst_2 = arith.constant 9.99999997E-7 : f32
    %7 = vector.broadcast %cst_2 : f32 to vector<16x1xf32>
    %8 = arith.addf %6, %7 : vector<16x1xf32>
    %9 = math.rsqrt %8 : vector<16x1xf32>
    %10 = vector.broadcast %9 : vector<16x1xf32> to vector<16x32xf32>
    %11 = arith.mulf %1, %10 : vector<16x32xf32>
    %c0_3 = arith.constant 0 : index
    %c0_4 = arith.constant 0 : index
    %12 = vector.load %arg2[%c0_3, %c0_4] : memref<1x32xf32, #tpu.memory_space<vmem>>, vector<1x32xf32>
    %13 = vector.broadcast %12 : vector<1x32xf32> to vector<16x32xf32>
    %14 = arith.mulf %11, %13 : vector<16x32xf32>
    %15 = arith.truncf %14 : vector<16x32xf32> to vector<16x32xbf16>
    %c0_5 = arith.constant 0 : index
    %c0_6 = arith.constant 0 : index
    %16 = vector.load %arg3[%c0_5, %c0_6] : memref<16x32xbf16, #tpu.memory_space<vmem>>, vector<16x32xbf16>
    tpu.vector_store %arg3[%c0_5, %c0_6], %15 {strides = array<i32>} : memref<16x32xbf16, #tpu.memory_space<vmem>>, vector<16x32xbf16>,
    return
  }
  func.func @transform_0(%arg0: i32) -> (i32, i32) {
    %c0_i32 = arith.constant 0 : i32
    %c0_i32_0 = arith.constant 0 : i32
    return %arg0, %c0_i32 : i32, i32
  }
  func.func @transform_1(%arg0: i32) -> (i32, i32) {
    %c0_i32 = arith.constant 0 : i32
    %c0_i32_0 = arith.constant 0 : i32
    %c0_i32_1 = arith.constant 0 : i32
    return %c0_i32, %c0_i32_0 : i32, i32
  }
  func.func @transform_2(%arg0: i32) -> (i32, i32) {
    %c0_i32 = arith.constant 0 : i32
    %c0_i32_0 = arith.constant 0 : i32
    return %arg0, %c0_i32 : i32, i32
  }
}

</mosaic_0001>

<llo_original>
// kernel: tpu_custom_call.1
$region0: #{tpu_custom_call.1}
  #allocation0 [shape = 'u32[]', space=smem, size = 0x4, offset = 0x4, fixed_abs, tag = 'smem constant byte address 0x4 - core index']
  #allocation1 [shape = 'u32[72,128]{1,0:T(1,128)}', space=vmem, size = 0x9000, scoped, tag = 'internal scratch']
  %s0 = inlined_call_operand.hbm [shape: bf16[16,32], index: 0, kind: input, shape index: {}]
  %s1 = inlined_call_operand.hbm [shape: f32[1,32], index: 1, kind: input, shape index: {}]
  %s2 = inlined_call_operand.hbm [shape: bf16[16,32], index: 2, kind: output, shape index: {}]
  %s3 = sld [smem:[#allocation0]]
  $region26: #{tpu_custom_call.1} parent=0
    _
  %s5 = ssub.s32 1, %s3
  %s6 = scalar_select 0, %s5, %s3
  $region1: #{tpu_custom_call.1} parent=0
    #allocation2 [shape = 'u8[4096]{0}', space=vmem, size = 0x1000, scoped, tag = 'input window, operand 0, single buffered']
    #allocation3 [shape = 's32[1]{0}', space=sflag, size = 0x4, scoped, tag = 'scoped memory for tpu_custom_call.1']
    #allocation4 [shape = 's32[1]{0}', space=sflag, size = 0x4, scoped, tag = 'scoped memory for tpu_custom_call.1']
    #allocation5 [shape = 'u8[512]{0}', space=vmem, size = 0x400, scoped, tag = 'input window, operand 1, single buffered']
    #allocation6 [shape = 's32[1]{0}', space=sflag, size = 0x4, scoped, tag = 'scoped memory for tpu_custom_call.1']
    #allocation7 [shape = 'u8[4096]{0}', space=vmem, size = 0x1000, scoped, tag = 'output window, operand 0, single buffered']
    %7 = vsyncpa [#allocation3], 0
    %8 = vsyncpa [#allocation6], 0
    %9 = vsyncpa [#allocation4], 0
    // Predicated region
    $region2: #{tpu_custom_call.1} parent=1 // pred_check
      _
    $region3: #{tpu_custom_call.1} parent=1 // pred_check_branch
      %11 = sbr.rel (0) target = $region5
    $region4: #{tpu_custom_call.1} parent=1 // pred_region
      %13 = vsyncadd [#allocation3], 0
      %s14 = sshll.u32 %s0, 4
      %s15 = int_to_ptr.hbm [resolvable:$true] %s14
      %s16 = sshll.u32 [#allocation2], 4
      %s17 = int_to_ptr.vmem [resolvable:$true] %s16
      %22 = dma.hbm_to_vmem [thread:$0]  %s15, 128, %s17, [#allocation3], 64, 64, 4
    $region5: #{tpu_custom_call.1} parent=1 // pred_fallthru
      _
    // Predicated region
    $region6: #{tpu_custom_call.1} parent=1 // pred_check
      _
    $region7: #{tpu_custom_call.1} parent=1 // pred_check_branch
      %24 = sbr.rel (0) target = $region9
    $region8: #{tpu_custom_call.1} parent=1 // pred_region
      %26 = vsyncadd [#allocation6], 0
      %s28 = sshll.u32 %s1, 4
      %s29 = int_to_ptr.hbm [resolvable:$true] %s28
      %s30 = sshll.u32 [#allocation5], 4
      %s31 = int_to_ptr.vmem [resolvable:$true] %s30
      %33 = dma.hbm_to_vmem [thread:$0]  %s29, 16, %s31, [#allocation6]
    $region9: #{tpu_custom_call.1} parent=1 // pred_fallthru
      _
    // Predicated region
    $region10: #{tpu_custom_call.1} parent=1 // pred_check
      _
    $region11: #{tpu_custom_call.1} parent=1 // pred_check_branch
      %35 = sbr.rel (0) target = $region13
    $region12: #{tpu_custom_call.1} parent=1 // pred_region
      %37 = dma.done [#allocation3], 128
    $region13: #{tpu_custom_call.1} parent=1 // pred_fallthru
      _
    // Predicated region
    $region14: #{tpu_custom_call.1} parent=1 // pred_check
      _
    $region15: #{tpu_custom_call.1} parent=1 // pred_check_branch
      %39 = sbr.rel (0) target = $region17
    $region16: #{tpu_custom_call.1} parent=1 // pred_region
      %41 = dma.done [#allocation6], 16
    $region17: #{tpu_custom_call.1} parent=1 // pred_fallthru
      _
    %v42 = vld [vmem:[#allocation2] sm:$0xf]
    %v43 = vld [vmem:[#allocation2 + $0x4] sm:$0xf]
    %v44 = vunpack.c.l.bf16 %v42
    %v45 = vunpack.c.l.bf16 %v43
    %v46 = vmul.f32 %v44, %v44
    %v47 = vmul.f32 %v45, %v45
    %vm48 = vcmask 261120
    %v49 = vsel %vm48, %v46, 0.0
    %50 = vadd.xlane.f32.xlu0 %v49
    %v51 = vpop.xlane.xlu0 %50
    %v52 = vsel %vm48, %v47, 0.0
    %53 = vadd.xlane.f32.xlu0 %v52
    %v54 = vpop.xlane.xlu0 %53
    %v55 = vmul.f32 %v51, 0.03125
    %v56 = vmul.f32 %v54, 0.03125
    %v57 = vadd.f32 %v55, 1e-06
    %v58 = vadd.f32 %v56, 1e-06
    %v59 = vrsqrt.pop %v57
    %v60 = vmul.f32 %v59, %v57
    %v61 = vmul.f32 %v60, %v59
    %v62 = vmul.f32 0.5, %v61
    %v63 = vsub.f32 1.5, %v62
    %v64 = vmul.f32 %v59, %v63
    %vm65 = vweird.f32 %v57
    %vm66 = vweird.f32 %v59
    %vm67 = vmor %vm65, %vm66
    %v68 = vsel %vm67, %v59, %v64
    %v69 = vrsqrt.pop %v58
    %v70 = vmul.f32 %v69, %v58
    %v71 = vmul.f32 %v70, %v69
    %v72 = vmul.f32 0.5, %v71
    %v73 = vsub.f32 1.5, %v72
    %v74 = vmul.f32 %v69, %v73
    %vm75 = vweird.f32 %v58
    %vm76 = vweird.f32 %v69
    %vm77 = vmor %vm75, %vm76
    %v78 = vsel %vm77, %v69, %v74
    %v79 = vmul.f32 %v44, %v68
    %v80 = vmul.f32 %v45, %v78
    %v81 = vld [vmem:[#allocation5] sm:$0x1]
    %v83 = vperm.slane %v81, 0
    %v85 = vmul.f32 %v79, %v83
    %v86 = vmul.f32 %v80, %v83
    %v87 = vpack.c.bf16 %v85, %v85
    %v88 = vpack.c.bf16 %v86, %v86
    %vm89 = vcmask 257024
    %90 = vst.msk [vmem:[#allocation7] sm:$0xf] %vm89, %v87
    %91 = vst.msk [vmem:[#allocation7 + $0x4] sm:$0xf] %vm89, %v88
    // Predicated region
    $region18: #{tpu_custom_call.1} parent=1 // pred_check
      _
    $region19: #{tpu_custom_call.1} parent=1 // pred_check_branch
      %93 = sbr.rel (0) target = $region21
    $region20: #{tpu_custom_call.1} parent=1 // pred_region
      %95 = vsyncadd [#allocation4], 0
      %s96 = sshll.u32 [#allocation7], 4
      %s97 = int_to_ptr.vmem [resolvable:$true] %s96
      %s98 = sshll.u32 %s2, 4
      %s99 = int_to_ptr.hbm [resolvable:$true] %s98
      %104 = dma.vmem_to_hbm [thread:$0]  %s97, 128, %s99, [#allocation4], 64, 64, 4
    $region21: #{tpu_custom_call.1} parent=1 // pred_fallthru
      _
    // Predicated region
    $region22: #{tpu_custom_call.1} parent=1 // pred_check
      _
    $region23: #{tpu_custom_call.1} parent=1 // pred_check_branch
      %106 = sbr.rel (0) target = $region25
    $region24: #{tpu_custom_call.1} parent=1 // pred_region
      %108 = dma.done [#allocation4], 128
    $region25: #{tpu_custom_call.1} parent=1 // pred_fallthru
      _
    %109 = vsyncpa [#allocation3], 1
    %110 = vsyncpa [#allocation6], 1
    %111 = vsyncpa [#allocation4], 1

</llo_original>
